<compile_context>
chip_gen: v5e
topology: v5e:2x2
jax: 0.10.0
libtpu: 0.0.40
codegen_flags: <defaults>
</compile_context>

<pallas_src>
import jax
import jax.numpy as jnp
from jax.experimental import pallas as pl
from jax.experimental.pallas import tpu as pltpu


def _bottleneck_kernel(x_ref, w1_ref, w2_ref, b_ref, o_ref):
    x = x_ref[...]                                   # (TN, C)
    x_f32 = x.astype(jnp.float32)                    # residual path stays f32
    x_mxu = x.astype(w1_ref.dtype)                   # MXU input dtype (bf16/f32)

    # linear1 (1x1 conv; BN1 scale pre-folded into the pre-transposed weight)
    # -> +bias -> ReLU.  No transpose, no scale multiply inside the kernel.
    h = jnp.dot(x_mxu, w1_ref[...], preferred_element_type=jnp.float32)
    h = jnp.maximum(h + b_ref[0:1, :], 0.0)

    # linear2 -> +bias -> residual add -> ReLU (elementwise epilogue in f32).
    h2 = jnp.dot(h.astype(w2_ref.dtype), w2_ref[...],
                 preferred_element_type=jnp.float32)
    out = jnp.maximum(h2 + b_ref[1:2, :] + x_f32, 0.0)

    o_ref[...] = out.astype(o_ref.dtype)


def bottleneck_linear(x, w1, bn1, w2, bn2, *, tile_n=None, mxu_dtype=jnp.bfloat16):
    """x: (N, C) float32.  w1/w2: (C, C) conv weights (C_out, C_in), i.e. the
    (C, C, 1, 1) Conv2d weights flattened.  bn1/bn2: dicts with gamma, beta,
    mean, var, eps (inference-mode BatchNorm)."""
    N, C = x.shape

    def fold(bn):
        scale = (bn["gamma"] / jnp.sqrt(bn["var"] + bn["eps"])).astype(jnp.float32)
        bias = (bn["beta"] - bn["mean"] * scale).astype(jnp.float32)
        return scale, bias

    s1, b1 = fold(bn1)
    s2, b2 = fold(bn2)

    # Fold the BN scale into the conv weight and pre-transpose to (C_in, C_out)
    # so the kernel computes a plain  x @ W_eff  on the MXU.
    w1_eff = (w1.astype(jnp.float32) * s1[:, None]).T.astype(mxu_dtype)
    w2_eff = (w2.astype(jnp.float32) * s2[:, None]).T.astype(mxu_dtype)
    bias = jnp.stack([b1, b2], axis=0)               # (2, C) f32, one input spec

    # Row-tile selection: aim for >= 4 grid steps (pipelining + megacore
    # sharding), sublane-aligned (multiple of 8), at most 512 rows per tile.
    if tile_n is None:
        tile_n = max(8, min(512, N // 4))
        tile_n = max(8, (tile_n // 8) * 8)
        tile_n = min(tile_n, N)
    itemsize = jnp.dtype(x.dtype).itemsize
    # Keep the double-buffered in+out tiles inside a conservative VMEM budget
    # (v7x: 64 MiB physical / 32 MiB scoped default).
    while tile_n > 8 and 2 * 2 * tile_n * C * itemsize > (16 << 20):
        tile_n = max(8, ((tile_n // 2) // 8) * 8)

    grid = (pl.cdiv(N, tile_n),)

    # VMEM estimate: double-buffered x/out tiles + resident weights + bias.
    w_itemsize = jnp.dtype(mxu_dtype).itemsize
    est = (2 * 2 * tile_n * C * itemsize        # x + out, double-buffered
           + 2 * 2 * C * C * w_itemsize          # two weight tiles (x2 buffers)
           + 2 * 2 * C * 4)                      # bias
    vmem_limit = int(min(64 << 20, max(est + (4 << 20), 8 << 20)))

    row_spec = pl.BlockSpec((tile_n, C), lambda i: (i, 0))   # x / out tiles over N
    w_spec = pl.BlockSpec((C, C), lambda i: (0, 0))          # resident weights
    b_spec = pl.BlockSpec((2, C), lambda i: (0, 0))          # packed BN biases

    return pl.pallas_call(
        _bottleneck_kernel,
        out_shape=jax.ShapeDtypeStruct((N, C), x.dtype),
        grid_spec=pltpu.PrefetchScalarGridSpec(
            num_scalar_prefetch=0,
            grid=grid,
            in_specs=[row_spec, w_spec, w_spec, b_spec],
            out_specs=row_spec,
        ),
        compiler_params=pltpu.CompilerParams(
            dimension_semantics=("parallel",),
            vmem_limit_bytes=vmem_limit),
    )(x, w1_eff, w2_eff, bias)


def _reference(x, w1, bn1, w2, bn2):
    def bn(h, p):
        return (h - p["mean"]) / jnp.sqrt(p["var"] + p["eps"]) * p["gamma"] + p["beta"]
    h = jnp.maximum(bn(x @ w1.T, bn1), 0.0)
    h2 = bn(h @ w2.T, bn2) + x
    return jnp.maximum(h2, 0.0)


if __name__ == "__main__":
    N, C = 256, 128  # small, tile-aligned (sublane=8, lane=128); grid of 4 tiles

    key = jax.random.PRNGKey(0)
    kx, kw1, kw2, kg1, kb1, km1, kv1, kg2, kb2, km2, kv2 = jax.random.split(key, 11)

    x = jax.random.normal(kx, (N, C), dtype=jnp.float32)

    # Conv2d(C, C, 1, bias=False) weights, flattened from (C, C, 1, 1) -> (C, C).
    bound = 1.0 / jnp.sqrt(jnp.float32(C))
    w1 = jax.random.uniform(kw1, (C, C), jnp.float32, -bound, bound)
    w2 = jax.random.uniform(kw2, (C, C), jnp.float32, -bound, bound)

    bn1 = dict(
        gamma=jax.random.uniform(kg1, (C,), jnp.float32, 0.5, 1.5),
        beta=jax.random.normal(kb1, (C,), jnp.float32) * 0.1,
        mean=jax.random.normal(km1, (C,), jnp.float32) * 0.1,
        var=jax.random.uniform(kv1, (C,), jnp.float32, 0.5, 1.5),
        eps=jnp.float32(1e-5),
    )
    bn2 = dict(
        gamma=jax.random.uniform(kg2, (C,), jnp.float32, 0.5, 1.5),
        beta=jax.random.normal(kb2, (C,), jnp.float32) * 0.1,
        mean=jax.random.normal(km2, (C,), jnp.float32) * 0.1,
        var=jax.random.uniform(kv2, (C,), jnp.float32, 0.5, 1.5),
        eps=jnp.float32(1e-5),
    )

    ref = _reference(x, w1, bn1, w2, bn2)

    # f32 MXU path: tight check of the restructured kernel (folded/pre-transposed
    # weights, packed biases, row tiling).
    out_f32 = jax.block_until_ready(
        bottleneck_linear(x, w1, bn1, w2, bn2, mxu_dtype=jnp.float32))
    assert out_f32.shape == (N, C)
    assert jnp.allclose(out_f32, ref, atol=1e-4, rtol=1e-4), "f32 path mismatch"

    # bf16 MXU-input path (v6e/v7x fast path): f32 accumulation + f32 epilogue,
    # checked at a tolerance appropriate for bf16 operand rounding.
    out_bf16 = jax.block_until_ready(
        bottleneck_linear(x, w1, bn1, w2, bn2, mxu_dtype=jnp.bfloat16))
    assert out_bf16.shape == (N, C)
    assert jnp.allclose(out_bf16, ref, atol=5e-2, rtol=5e-2), "bf16 path mismatch"

    print("KERNEL_OK")
</pallas_src>

<mosaic_0001>
module attributes {stable_mosaic.version = 11 : i64} {
  func.func @_bottleneck_kernel(%arg0: i32, %arg1: memref<64x128xf32, #tpu.memory_space<vmem>>, %arg2: memref<128x128xf32, #tpu.memory_space<vmem>>, %arg3: memref<128x128xf32, #tpu.memory_space<vmem>>, %arg4: memref<2x128xf32, #tpu.memory_space<vmem>>, %arg5: memref<64x128xf32, #tpu.memory_space<vmem>>) attributes {dimension_semantics = [#tpu.dimension_semantics<parallel>], iteration_bounds = array<i64: 4>, scalar_prefetch = 0 : i64, scratch_operands = 0 : i64, tpu.core_type = #tpu.core_type<tc>, window_params = [{transform_indices = @transform_0, window_bounds = array<i64: 64, 128>}, {pipeline_mode = #tpu.pipeline_mode<synchronous>, transform_indices = @transform_1, window_bounds = array<i64: 128, 128>}, {pipeline_mode = #tpu.pipeline_mode<synchronous>, transform_indices = @transform_2, window_bounds = array<i64: 128, 128>}, {pipeline_mode = #tpu.pipeline_mode<synchronous>, transform_indices = @transform_3, window_bounds = array<i64: 2, 128>}, {transform_indices = @transform_4, window_bounds = array<i64: 64, 128>}]} {
    %c0 = arith.constant 0 : index
    %c0_0 = arith.constant 0 : index
    %0 = vector.load %arg1[%c0, %c0_0] : memref<64x128xf32, #tpu.memory_space<vmem>>, vector<64x128xf32>
    %c0_1 = arith.constant 0 : index
    %c0_2 = arith.constant 0 : index
    %1 = vector.load %arg2[%c0_1, %c0_2] : memref<128x128xf32, #tpu.memory_space<vmem>>, vector<128x128xf32>
    %cst = arith.constant dense<0.000000e+00> : vector<64x128xf32>
    %2 = tpu.matmul %0, %1, %cst {dimension_numbers = #tpu.dot_dimension_numbers<[1], [0], [0], [1], [0, 0, 1, 1], [], []>} : vector<64x128xf32>, vector<128x128xf32>, vector<64x128xf32> -> vector<64x128xf32>
    %c0_3 = arith.constant 0 : index
    %c0_4 = arith.constant 0 : index
    %3 = vector.load %arg4[%c0_3, %c0_4] : memref<2x128xf32, #tpu.memory_space<vmem>>, vector<1x128xf32>
    %4 = vector.broadcast %3 : vector<1x128xf32> to vector<64x128xf32>
    %5 = arith.addf %2, %4 : vector<64x128xf32>
    %cst_5 = arith.constant 0.000000e+00 : f32
    %6 = vector.broadcast %cst_5 : f32 to vector<64x128xf32>
    %7 = arith.maximumf %5, %6 : vector<64x128xf32>
    %c0_6 = arith.constant 0 : index
    %c0_7 = arith.constant 0 : index
    %8 = vector.load %arg3[%c0_6, %c0_7] : memref<128x128xf32, #tpu.memory_space<vmem>>, vector<128x128xf32>
    %cst_8 = arith.constant dense<0.000000e+00> : vector<64x128xf32>
    %9 = tpu.matmul %7, %8, %cst_8 {dimension_numbers = #tpu.dot_dimension_numbers<[1], [0], [0], [1], [0, 0, 1, 1], [], []>} : vector<64x128xf32>, vector<128x128xf32>, vector<64x128xf32> -> vector<64x128xf32>
    %c1 = arith.constant 1 : index
    %c0_9 = arith.constant 0 : index
    %10 = vector.load %arg4[%c1, %c0_9] : memref<2x128xf32, #tpu.memory_space<vmem>>, vector<1x128xf32>
    %11 = vector.broadcast %10 : vector<1x128xf32> to vector<64x128xf32>
    %12 = arith.addf %9, %11 : vector<64x128xf32>
    %13 = arith.addf %12, %0 : vector<64x128xf32>
    %cst_10 = arith.constant 0.000000e+00 : f32
    %14 = vector.broadcast %cst_10 : f32 to vector<64x128xf32>
    %15 = arith.maximumf %13, %14 : vector<64x128xf32>
    %c0_11 = arith.constant 0 : index
    %c0_12 = arith.constant 0 : index
    %16 = vector.load %arg5[%c0_11, %c0_12] : memref<64x128xf32, #tpu.memory_space<vmem>>, vector<64x128xf32>
    tpu.vector_store %arg5[%c0_11, %c0_12], %15 {strides = array<i32>} : memref<64x128xf32, #tpu.memory_space<vmem>>, vector<64x128xf32>,
    return
  }
  func.func @transform_0(%arg0: i32) -> (i32, i32) {
    %c0_i32 = arith.constant 0 : i32
    %c0_i32_0 = arith.constant 0 : i32
    return %arg0, %c0_i32 : i32, i32
  }
  func.func @transform_1(%arg0: i32) -> (i32, i32) {
    %c0_i32 = arith.constant 0 : i32
    %c0_i32_0 = arith.constant 0 : i32
    %c0_i32_1 = arith.constant 0 : i32
    return %c0_i32, %c0_i32_0 : i32, i32
  }
  func.func @transform_2(%arg0: i32) -> (i32, i32) {
    %c0_i32 = arith.constant 0 : i32
    %c0_i32_0 = arith.constant 0 : i32
    %c0_i32_1 = arith.constant 0 : i32
    return %c0_i32, %c0_i32_0 : i32, i32
  }
  func.func @transform_3(%arg0: i32) -> (i32, i32) {
    %c0_i32 = arith.constant 0 : i32
    %c0_i32_0 = arith.constant 0 : i32
    %c0_i32_1 = arith.constant 0 : i32
    return %c0_i32, %c0_i32_0 : i32, i32
  }
  func.func @transform_4(%arg0: i32) -> (i32, i32) {
    %c0_i32 = arith.constant 0 : i32
    %c0_i32_0 = arith.constant 0 : i32
    return %arg0, %c0_i32 : i32, i32
  }
}

</mosaic_0001>

<llo_original>
// kernel: tpu_custom_call.1
$region0: #{tpu_custom_call.1}
  #allocation0 [shape = 'u32[]', space=smem, size = 0x4, offset = 0x4, fixed_abs, tag = 'smem constant byte address 0x4 - core index']
  #allocation1 [shape = 'u32[72,128]{1,0:T(1,128)}', space=vmem, size = 0x9000, scoped, tag = 'internal scratch']
  %s0 = inlined_call_operand.hbm [shape: f32[256,128], index: 0, kind: input, shape index: {}]
  %s1 = inlined_call_operand.hbm [shape: f32[128,128], index: 1, kind: input, shape index: {}]
  %s2 = inlined_call_operand.hbm [shape: f32[128,128], index: 2, kind: input, shape index: {}]
  %s3 = inlined_call_operand.vmem [shape: f32[2,128], index: 3, kind: input, shape index: {}]
  %s4 = inlined_call_operand.hbm [shape: f32[256,128], index: 4, kind: output, shape index: {}]
  %s5 = sld [smem:[#allocation0]]
  $region61: #{tpu_custom_call.1} parent=0
    _
  %s7 = ssub.s32 1, %s5
  %s8 = scalar_select 0, %s7, %s5
  $region1: #{tpu_custom_call.1} parent=0
    #allocation2 [shape = 'u8[65536]{0}', space=vmem, size = 0x10000, scoped, tag = 'input window, operand 0']
    #allocation3 [shape = 's32[2]{0}', space=sflag, size = 0x8, scoped, tag = 'scoped memory for tpu_custom_call.1']
    #allocation4 [shape = 's32[2]{0}', space=sflag, size = 0x8, scoped, tag = 'scoped memory for tpu_custom_call.1']
    #allocation5 [shape = 'u8[65536]{0}', space=vmem, size = 0x10000, scoped, tag = 'input window, operand 1, single buffered']
    #allocation6 [shape = 's32[1]{0}', space=sflag, size = 0x4, scoped, tag = 'scoped memory for tpu_custom_call.1']
    #allocation7 [shape = 'u8[65536]{0}', space=vmem, size = 0x10000, scoped, tag = 'input window, operand 2, single buffered']
    #allocation8 [shape = 'u8[65536]{0}', space=vmem, size = 0x10000, scoped, tag = 'output window, operand 0']
    %9 = vsyncpa [#allocation3], 0
    %s10 = scalar_lea.sflag [#allocation3], 1
    %11 = vsyncpa %s10, 0
    %12 = vsyncpa [#allocation6], 0
    %13 = vsyncpa [#allocation4], 0
    %s14 = scalar_lea.sflag [#allocation4], 1
    %15 = vsyncpa %s14, 0
    loop: start=0, step=1, limit=6
    $region2: #{tpu_custom_call.1} parent=1 // loop_pre_header
      _
    $region3: #{tpu_custom_call.1} parent=1 // loop_header
      %s17 = sphi 0, %s21
      %p18 = scmp.ge.s32.totalorder %s17, 6
      %s27 = sphi 0, %s29
      %s30 = sphi 0, %s27
      %s31 = sphi 0, %s30
      %s47 = sphi 0, %s31
      %s51 = sphi 0, %s51
      %s53 = sphi 0, %s51
      %s54 = sphi 0, %s53
      %s68 = sphi 0, %s54
      %s72 = sphi 0, %s72
      %s74 = sphi 0, %s72
      %s75 = sphi 0, %s74
      %s89 = sphi 0, %s75
      %s93 = sphi 0, %s93
      %s95 = sphi 0, %s93
      %s96 = sphi 0, %s95
      %s110 = sphi 0, %s96
      %s116 = sphi 0, %s118
      %s119 = sphi 0, %s116
      %s120 = sphi 0, %s119
      %s136 = sphi 0, %s120
    $region4: #{tpu_custom_call.1} parent=1 // loop_header_branch
      %20 = sbr.rel (%p18) target = $region8
    $region5: #{tpu_custom_call.1} parent=1 // loop_body
      %s22 = ssub.s32 %s17, 1
      %s23 = ssub.s32 %s17, 2
      %s24 = sadd.s32 %s17, 1
      %s25 = ssub.s32 %s17, %s24
      %p26 = scmp.eq.s32.totalorder %s25, 0
      %s28 = sadd.s32 %s27, 1
      %s29 = scalar_select %p26, %s27, %s28
      %p32 = pneg %p26
      %p33 = scmp.eq.s32.totalorder %s17, 3
      %p34 = por %p32, %p33
      %p35 = scmp.ne.s32.totalorder %s27, %s30
      %p36 = scmp.eq.s32.totalorder %s17, 0
      %p37 = por %p35, %p36
      %p38 = scmp.ne.s32.totalorder %s27, %s30
      %p39 = scmp.eq.s32.totalorder %s22, 3
      %p40 = por %p38, %p39
      %p41 = scmp.ne.s32.totalorder %s30, %s31
      %p42 = scmp.eq.s32.totalorder %s22, 0
      %p43 = por %p41, %p42
      %p44 = scmp.ne.s32.totalorder %s30, %s31
      %p45 = scmp.eq.s32.totalorder %s23, 3
      %p46 = por %p44, %p45
      %p48 = scmp.ne.s32.totalorder %s31, %s47
      %p49 = scmp.eq.s32.totalorder %s23, 0
      %p50 = por %p48, %p49
      %s52 = sadd.s32 %s51, 1
      %p55 = scmp.eq.s32.totalorder %s17, 3
      %p56 = scmp.ne.s32.totalorder %s51, %s53
      %p57 = scmp.eq.s32.totalorder %s17, 0
      %p58 = por %p56, %p57
      %p59 = scmp.ne.s32.totalorder %s51, %s53
      %p60 = scmp.eq.s32.totalorder %s22, 3
      %p61 = por %p59, %p60
      %p62 = scmp.ne.s32.totalorder %s53, %s54
      %p63 = scmp.eq.s32.totalorder %s22, 0
      %p64 = por %p62, %p63
      %p65 = scmp.ne.s32.totalorder %s53, %s54
      %p66 = scmp.eq.s32.totalorder %s23, 3
      %p67 = por %p65, %p66
      %p69 = scmp.ne.s32.totalorder %s54, %s68
      %p70 = scmp.eq.s32.totalorder %s23, 0
      %p71 = por %p69, %p70
      %s73 = sadd.s32 %s72, 1
      %p76 = scmp.eq.s32.totalorder %s17, 3
      %p77 = scmp.ne.s32.totalorder %s72, %s74
      %p78 = scmp.eq.s32.totalorder %s17, 0
      %p79 = por %p77, %p78
      %p80 = scmp.ne.s32.totalorder %s72, %s74
      %p81 = scmp.eq.s32.totalorder %s22, 3
      %p82 = por %p80, %p81
      %p83 = scmp.ne.s32.totalorder %s74, %s75
      %p84 = scmp.eq.s32.totalorder %s22, 0
      %p85 = por %p83, %p84
      %p86 = scmp.ne.s32.totalorder %s74, %s75
      %p87 = scmp.eq.s32.totalorder %s23, 3
      %p88 = por %p86, %p87
      %p90 = scmp.ne.s32.totalorder %s75, %s89
      %p91 = scmp.eq.s32.totalorder %s23, 0
      %p92 = por %p90, %p91
      %s94 = sadd.s32 %s93, 1
      %p97 = scmp.eq.s32.totalorder %s17, 3
      %p98 = scmp.ne.s32.totalorder %s93, %s95
      %p99 = scmp.eq.s32.totalorder %s17, 0
      %p100 = por %p98, %p99
      %p101 = scmp.ne.s32.totalorder %s93, %s95
      %p102 = scmp.eq.s32.totalorder %s22, 3
      %p103 = por %p101, %p102
      %p104 = scmp.ne.s32.totalorder %s95, %s96
      %p105 = scmp.eq.s32.totalorder %s22, 0
      %p106 = por %p104, %p105
      %p107 = scmp.ne.s32.totalorder %s95, %s96
      %p108 = scmp.eq.s32.totalorder %s23, 3
      %p109 = por %p107, %p108
      %p111 = scmp.ne.s32.totalorder %s96, %s110
      %p112 = scmp.eq.s32.totalorder %s23, 0
      %p113 = por %p111, %p112
      %s114 = ssub.s32 %s17, %s24
      %p115 = scmp.eq.s32.totalorder %s114, 0
      %s117 = sadd.s32 %s116, 1
      %s118 = scalar_select %p115, %s116, %s117
      %p121 = pneg %p115
      %p122 = scmp.eq.s32.totalorder %s17, 3
      %p123 = por %p121, %p122
      %p124 = scmp.ne.s32.totalorder %s116, %s119
      %p125 = scmp.eq.s32.totalorder %s17, 0
      %p126 = por %p124, %p125
      %p127 = scmp.ne.s32.totalorder %s116, %s119
      %p128 = scmp.eq.s32.totalorder %s22, 3
      %p129 = por %p127, %p128
      %p130 = scmp.ne.s32.totalorder %s119, %s120
      %p131 = scmp.eq.s32.totalorder %s22, 0
      %p132 = por %p130, %p131
      %p133 = scmp.ne.s32.totalorder %s119, %s120
      %p134 = scmp.eq.s32.totalorder %s23, 3
      %p135 = por %p133, %p134
      %p137 = scmp.ne.s32.totalorder %s120, %s136
      %p138 = scmp.eq.s32.totalorder %s23, 0
      %p139 = por %p137, %p138
      %p140 = scmp.le.s32.totalorder 1, %s17
      %p141 = scmp.lt.s32.totalorder %s17, 5
      %p142 = pnand %p140, %p141
      %p143 = pneg %p142
      // Predicated region
      $region9: #{tpu_custom_call.1} parent=5 // pred_check
        _
      $region10: #{tpu_custom_call.1} parent=5 // pred_check_branch
        %145 = sbr.rel (%p142) target = $region12
      $region11: #{tpu_custom_call.1} parent=5 // pred_region
        %s146 = ssub.s32 %s17, 1
        // Predicated region
        $region13: #{tpu_custom_call.1} parent=11 // pred_check
          %p147 = pneg %p64
        $region14: #{tpu_custom_call.1} parent=11 // pred_check_branch
          %149 = sbr.rel (%p147) target = $region16
        $region15: #{tpu_custom_call.1} parent=11 // pred_region
          %151 = vsyncadd [#allocation6], 0
          %s152 = sshll.u32 %s1, 4
          %s153 = int_to_ptr.hbm [resolvable:$true] %s152
          %s154 = sshll.u32 [#allocation5], 4
          %s155 = int_to_ptr.vmem [resolvable:$true] %s154
          %160 = dma.hbm_to_vmem [thread:$0]  %s153, 2048, %s155, [#allocation6], 128, 128, 8
        $region16: #{tpu_custom_call.1} parent=11 // pred_fallthru
          _
        // Predicated region
        $region17: #{tpu_custom_call.1} parent=11 // pred_check
          %p161 = pneg %p85
        $region18: #{tpu_custom_call.1} parent=11 // pred_check_branch
          %163 = sbr.rel (%p161) target = $region20
        $region19: #{tpu_custom_call.1} parent=11 // pred_region
          %165 = vsyncadd [#allocation6], 0
          %s166 = sshll.u32 %s2, 4
          %s167 = int_to_ptr.hbm [resolvable:$true] %s166
          %s168 = sshll.u32 [#allocation7], 4
          %s169 = int_to_ptr.vmem [resolvable:$true] %s168
          %174 = dma.hbm_to_vmem [thread:$0]  %s167, 2048, %s169, [#allocation6], 128, 128, 8
        $region20: #{tpu_custom_call.1} parent=11 // pred_fallthru
          _
        // Predicated region
        $region21: #{tpu_custom_call.1} parent=11 // pred_check
          %p175 = pneg %p106
        $region22: #{tpu_custom_call.1} parent=11 // pred_check_branch
          %177 = sbr.rel (%p175) target = $region24
        $region23: #{tpu_custom_call.1} parent=11 // pred_region
          _
        $region24: #{tpu_custom_call.1} parent=11 // pred_fallthru
          _
      $region12: #{tpu_custom_call.1} parent=5 // pred_fallthru
        _
      %p178 = scmp.lt.s32.totalorder %s17, 4
      // Predicated region
      $region25: #{tpu_custom_call.1} parent=5 // pred_check
        %p179 = pneg %p178
      $region26: #{tpu_custom_call.1} parent=5 // pred_check_branch
        %181 = sbr.rel (%p179) target = $region28
      $region27: #{tpu_custom_call.1} parent=5 // pred_region
        // Predicated region
        $region29: #{tpu_custom_call.1} parent=27 // pred_check
          %p182 = pneg %p37
        $region30: #{tpu_custom_call.1} parent=27 // pred_check_branch
          %184 = sbr.rel (%p182) target = $region32
        $region31: #{tpu_custom_call.1} parent=27 // pred_region
          %s185 = sand.u32 %s27, 1
          %s186 = scalar_lea.sflag [#allocation3], %s185
          %s187 = sand.u32 %s27, 1
          %s188 = smul.addr %s187, 64
          %s189 = scalar_lea.vmem [#allocation2], %s188
          %s190 = smul.u32 8, %s17
          %192 = vsyncadd %s186, 0
          %s193 = smul.addr %s190, 8
          %s194 = scalar_lea.hbm %s0, %s193
          %s195 = sshll.u32 %s194, 4
          %s196 = int_to_ptr.hbm [resolvable:$true] %s195
          %s197 = sshll.u32 %s189, 4
          %s198 = int_to_ptr.vmem [resolvable:$true] %s197
          %203 = dma.hbm_to_vmem [thread:$0]  %s196, 1024, %s198, %s186, 128, 128, 8
        $region32: #{tpu_custom_call.1} parent=27 // pred_fallthru
          _
      $region28: #{tpu_custom_call.1} parent=5 // pred_fallthru
        _
      %p204 = scmp.le.s32.totalorder 1, %s17
      %p205 = scmp.lt.s32.totalorder %s17, 5
      %p206 = pnand %p204, %p205
      %p207 = pneg %p206
      // Predicated region
      $region33: #{tpu_custom_call.1} parent=5 // pred_check
        _
      $region34: #{tpu_custom_call.1} parent=5 // pred_check_branch
        %209 = sbr.rel (%p206) target = $region36
      $region35: #{tpu_custom_call.1} parent=5 // pred_region
        %s210 = ssub.s32 %s17, 1
        %s211 = sand.u32 %s30, 1
        %s212 = scalar_lea.sflag [#allocation3], %s211
        %s213 = sand.u32 %s30, 1
        %s214 = smul.addr %s213, 64
        %s215 = scalar_lea.vmem [#allocation2], %s214
        // Predicated region
        $region37: #{tpu_custom_call.1} parent=35 // pred_check
          %p216 = pneg %p43
        $region38: #{tpu_custom_call.1} parent=35 // pred_check_branch
          %218 = sbr.rel (%p216) target = $region40
        $region39: #{tpu_custom_call.1} parent=35 // pred_region
          %220 = dma.done %s212, 1024
        $region40: #{tpu_custom_call.1} parent=35 // pred_fallthru
          _
        // Predicated region
        $region41: #{tpu_custom_call.1} parent=35 // pred_check
          %p221 = pneg %p64
        $region42: #{tpu_custom_call.1} parent=35 // pred_check_branch
          %223 = sbr.rel (%p221) target = $region44
        $region43: #{tpu_custom_call.1} parent=35 // pred_region
          %225 = dma.done [#allocation6], 2048
        $region44: #{tpu_custom_call.1} parent=35 // pred_fallthru
          _
        // Predicated region
        $region45: #{tpu_custom_call.1} parent=35 // pred_check
          %p226 = pneg %p85
        $region46: #{tpu_custom_call.1} parent=35 // pred_check_branch
          %228 = sbr.rel (%p226) target = $region48
        $region47: #{tpu_custom_call.1} parent=35 // pred_region
          %230 = dma.done [#allocation6], 2048
        $region48: #{tpu_custom_call.1} parent=35 // pred_fallthru
          _
        %s231 = sand.u32 %s30, 1
        %s232 = scalar_lea.sflag [#allocation3], %s231
        %s233 = sand.u32 %s30, 1
        %s234 = smul.addr %s233, 64
        %s235 = scalar_lea.vmem [#allocation2], %s234
        %p236 = pneg %p43
        %p237 = pneg %p40
        %p238 = pneg %p64
        %p239 = pneg %p61
        %p240 = pneg %p85
        %p241 = pneg %p82
        %p242 = pneg %p106
        %p243 = pneg %p103
        %p244 = pneg %p132
        %p245 = pneg %p129
        %s246 = sand.u32 %s119, 1
        %s247 = scalar_lea.sflag [#allocation4], %s246
        %s248 = sand.u32 %s119, 1
        %s249 = smul.addr %s248, 64
        %s250 = scalar_lea.vmem [#allocation8], %s249
        %s251 = smul.u32 8, %s22
        %s252 = smul.u32 8, %s22
        %v253 = vld [vmem:[%s215] sm:$0xff]
        %v254 = vld [vmem:[%s215 + $0x8] sm:$0xff]
        %v255 = vld [vmem:[%s215 + $0x10] sm:$0xff]
        %v256 = vld [vmem:[%s215 + $0x18] sm:$0xff]
        %v257 = vld [vmem:[%s215 + $0x20] sm:$0xff]
        %v258 = vld [vmem:[%s215 + $0x28] sm:$0xff]
        %v259 = vld [vmem:[%s215 + $0x30] sm:$0xff]
        %v260 = vld [vmem:[%s215 + $0x38] sm:$0xff]
        %v261 = vld [vmem:[#allocation5] sm:$0xff]
        %v262 = vld [vmem:[#allocation5 + $0x8] sm:$0xff]
        %v263 = vld [vmem:[#allocation5 + $0x10] sm:$0xff]
        %v264 = vld [vmem:[#allocation5 + $0x18] sm:$0xff]
        %v265 = vld [vmem:[#allocation5 + $0x20] sm:$0xff]
        %v266 = vld [vmem:[#allocation5 + $0x28] sm:$0xff]
        %v267 = vld [vmem:[#allocation5 + $0x30] sm:$0xff]
        %v268 = vld [vmem:[#allocation5 + $0x38] sm:$0xff]
        %v269 = vld [vmem:[#allocation5 + $0x40] sm:$0xff]
        %v270 = vld [vmem:[#allocation5 + $0x48] sm:$0xff]
        %v271 = vld [vmem:[#allocation5 + $0x50] sm:$0xff]
        %v272 = vld [vmem:[#allocation5 + $0x58] sm:$0xff]
        %v273 = vld [vmem:[#allocation5 + $0x60] sm:$0xff]
        %v274 = vld [vmem:[#allocation5 + $0x68] sm:$0xff]
        %v275 = vld [vmem:[#allocation5 + $0x70] sm:$0xff]
        %v276 = vld [vmem:[#allocation5 + $0x78] sm:$0xff]
        %v277 = vld [vmem:[%s3] sm:$0x1]
        %v278 = vperm.slane %v277, 0
        %279 = vmatpush.msra.mxu0 %v276
        %280 = vmatpush.msra.mxu0 %v275
        %281 = vmatpush.msra.mxu0 %v274
        %282 = vmatpush.msra.mxu0 %v273
        %283 = vmatpush.msra.mxu0 %v272
        %284 = vmatpush.msra.mxu0 %v271
        %285 = vmatpush.msra.mxu0 %v270
        %286 = vmatpush.msra.mxu0 %v269
        %287 = vmatpush.msra.mxu0 %v268
        %288 = vmatpush.msra.mxu0 %v267
        %289 = vmatpush.msra.mxu0 %v266
        %290 = vmatpush.msra.mxu0 %v265
        %291 = vmatpush.msra.mxu0 %v264
        %292 = vmatpush.msra.mxu0 %v263
        %293 = vmatpush.msra.mxu0 %v262
        %294 = vmatpush.msra.mxu0 %v261
        %295 = vmatmul.f32.gmra.mxu0 %v253
        %v296 = vpop.f32.mrf.mxu0
        %v297 = vadd.f32 %v278, %v296
        %298 = vmatmul.f32.gmra.mxu0 %v254
        %v299 = vpop.f32.mrf.mxu0
        %v300 = vadd.f32 %v278, %v299
        %301 = vmatmul.f32.gmra.mxu0 %v255
        %v302 = vpop.f32.mrf.mxu0
        %v303 = vadd.f32 %v278, %v302
        %304 = vmatmul.f32.gmra.mxu0 %v256
        %v305 = vpop.f32.mrf.mxu0
        %v306 = vadd.f32 %v278, %v305
        %307 = vmatmul.f32.gmra.mxu0 %v257
        %v308 = vpop.f32.mrf.mxu0
        %v309 = vadd.f32 %v278, %v308
        %310 = vmatmul.f32.gmra.mxu0 %v258
        %v311 = vpop.f32.mrf.mxu0
        %v312 = vadd.f32 %v278, %v311
        %313 = vmatmul.f32.gmra.mxu0 %v259
        %v314 = vpop.f32.mrf.mxu0
        %v315 = vadd.f32 %v278, %v314
        %316 = vmatmul.f32.gmra.mxu0 %v260
        %v317 = vpop.f32.mrf.mxu0
        %v318 = vadd.f32 %v278, %v317
        %319 = vdwg.mxu0
        %v320 = vmax.f32 %v297, 0.0
        %v321 = vmax.f32 %v300, 0.0
        %v322 = vmax.f32 %v303, 0.0
        %v323 = vmax.f32 %v306, 0.0
        %v324 = vmax.f32 %v309, 0.0
        %v325 = vmax.f32 %v312, 0.0
        %v326 = vmax.f32 %v315, 0.0
        %v327 = vmax.f32 %v318, 0.0
        %v328 = vld [vmem:[#allocation7] sm:$0xff]
        %v329 = vld [vmem:[#allocation7 + $0x8] sm:$0xff]
        %v330 = vld [vmem:[#allocation7 + $0x10] sm:$0xff]
        %v331 = vld [vmem:[#allocation7 + $0x18] sm:$0xff]
        %v332 = vld [vmem:[#allocation7 + $0x20] sm:$0xff]
        %v333 = vld [vmem:[#allocation7 + $0x28] sm:$0xff]
        %v334 = vld [vmem:[#allocation7 + $0x30] sm:$0xff]
        %v335 = vld [vmem:[#allocation7 + $0x38] sm:$0xff]
        %v336 = vld [vmem:[#allocation7 + $0x40] sm:$0xff]
        %v337 = vld [vmem:[#allocation7 + $0x48] sm:$0xff]
        %v338 = vld [vmem:[#allocation7 + $0x50] sm:$0xff]
        %v339 = vld [vmem:[#allocation7 + $0x58] sm:$0xff]
        %v340 = vld [vmem:[#allocation7 + $0x60] sm:$0xff]
        %v341 = vld [vmem:[#allocation7 + $0x68] sm:$0xff]
        %v342 = vld [vmem:[#allocation7 + $0x70] sm:$0xff]
        %v343 = vld [vmem:[#allocation7 + $0x78] sm:$0xff]
        %v344 = vld [vmem:[%s3 + $0x1] sm:$0x1]
        %v345 = vperm.slane %v344, 0
        %346 = vmatpush.msra.mxu0 %v343
        %347 = vmatpush.msra.mxu0 %v342
        %348 = vmatpush.msra.mxu0 %v341
        %349 = vmatpush.msra.mxu0 %v340
        %350 = vmatpush.msra.mxu0 %v339
        %351 = vmatpush.msra.mxu0 %v338
        %352 = vmatpush.msra.mxu0 %v337
        %353 = vmatpush.msra.mxu0 %v336
        %354 = vmatpush.msra.mxu0 %v335
        %355 = vmatpush.msra.mxu0 %v334
        %356 = vmatpush.msra.mxu0 %v333
        %357 = vmatpush.msra.mxu0 %v332
        %358 = vmatpush.msra.mxu0 %v331
        %359 = vmatpush.msra.mxu0 %v330
        %360 = vmatpush.msra.mxu0 %v329
        %361 = vmatpush.msra.mxu0 %v328
        %362 = vmatmul.f32.gmra.mxu0 %v320
        %v363 = vpop.f32.mrf.mxu0
        %v364 = vadd.f32 %v345, %v363
        %365 = vmatmul.f32.gmra.mxu0 %v321
        %v366 = vpop.f32.mrf.mxu0
        %v367 = vadd.f32 %v345, %v366
        %368 = vmatmul.f32.gmra.mxu0 %v322
        %v369 = vpop.f32.mrf.mxu0
        %v370 = vadd.f32 %v345, %v369
        %371 = vmatmul.f32.gmra.mxu0 %v323
        %v372 = vpop.f32.mrf.mxu0
        %v373 = vadd.f32 %v345, %v372
        %374 = vmatmul.f32.gmra.mxu0 %v324
        %v375 = vpop.f32.mrf.mxu0
        %v376 = vadd.f32 %v345, %v375
        %377 = vmatmul.f32.gmra.mxu0 %v325
        %v378 = vpop.f32.mrf.mxu0
        %v379 = vadd.f32 %v345, %v378
        %380 = vmatmul.f32.gmra.mxu0 %v326
        %v381 = vpop.f32.mrf.mxu0
        %v382 = vadd.f32 %v345, %v381
        %383 = vmatmul.f32.gmra.mxu0 %v327
        %v384 = vpop.f32.mrf.mxu0
        %v385 = vadd.f32 %v345, %v384
        %386 = vdwg.mxu0
        %v387 = vadd.f32 %v364, %v253
        %v388 = vadd.f32 %v367, %v254
        %v389 = vadd.f32 %v370, %v255
        %v390 = vadd.f32 %v373, %v256
        %v391 = vadd.f32 %v376, %v257
        %v392 = vadd.f32 %v379, %v258
        %v393 = vadd.f32 %v382, %v259
        %v394 = vadd.f32 %v385, %v260
        %v395 = vmax.f32 %v387, 0.0
        %v396 = vmax.f32 %v388, 0.0
        %v397 = vmax.f32 %v389, 0.0
        %v398 = vmax.f32 %v390, 0.0
        %v399 = vmax.f32 %v391, 0.0
        %v400 = vmax.f32 %v392, 0.0
        %v401 = vmax.f32 %v393, 0.0
        %v402 = vmax.f32 %v394, 0.0
        %403 = vst [vmem:[%s250] sm:$0xff] %v395
        %404 = vst [vmem:[%s250 + $0x8] sm:$0xff] %v396
        %405 = vst [vmem:[%s250 + $0x10] sm:$0xff] %v397
        %406 = vst [vmem:[%s250 + $0x18] sm:$0xff] %v398
        %407 = vst [vmem:[%s250 + $0x20] sm:$0xff] %v399
        %408 = vst [vmem:[%s250 + $0x28] sm:$0xff] %v400
        %409 = vst [vmem:[%s250 + $0x30] sm:$0xff] %v401
        %410 = vst [vmem:[%s250 + $0x38] sm:$0xff] %v402
        %s411 = sand.u32 %s119, 1
        %s412 = scalar_lea.sflag [#allocation4], %s411
        %s413 = sand.u32 %s119, 1
        %s414 = smul.addr %s413, 64
        %s415 = scalar_lea.vmem [#allocation8], %s414
        // Predicated region
        $region49: #{tpu_custom_call.1} parent=35 // pred_check
          %p416 = pneg %p129
        $region50: #{tpu_custom_call.1} parent=35 // pred_check_branch
          %418 = sbr.rel (%p416) target = $region52
        $region51: #{tpu_custom_call.1} parent=35 // pred_region
          %s419 = smul.u32 8, %s22
          %421 = vsyncadd %s412, 0
          %s422 = smul.addr %s419, 8
          %s423 = scalar_lea.hbm %s4, %s422
          %s424 = sshll.u32 %s415, 4
          %s425 = int_to_ptr.vmem [resolvable:$true] %s424
          %s426 = sshll.u32 %s423, 4
          %s427 = int_to_ptr.hbm [resolvable:$true] %s426
          %432 = dma.vmem_to_hbm [thread:$0]  %s425, 1024, %s427, %s412, 128, 128, 8
        $region52: #{tpu_custom_call.1} parent=35 // pred_fallthru
          _
      $region36: #{tpu_custom_call.1} parent=5 // pred_fallthru
        _
      %p433 = scmp.le.s32.totalorder 2, %s17
      // Predicated region
      $region53: #{tpu_custom_call.1} parent=5 // pred_check
        %p434 = pneg %p433
      $region54: #{tpu_custom_call.1} parent=5 // pred_check_branch
        %436 = sbr.rel (%p434) target = $region56
      $region55: #{tpu_custom_call.1} parent=5 // pred_region
        %s437 = ssub.s32 %s17, 2
        // Predicated region
        $region57: #{tpu_custom_call.1} parent=55 // pred_check
          %p438 = pneg %p135
        $region58: #{tpu_custom_call.1} parent=55 // pred_check_branch
          %440 = sbr.rel (%p438) target = $region60
        $region59: #{tpu_custom_call.1} parent=55 // pred_region
          %s441 = sand.u32 %s120, 1
          %s442 = scalar_lea.sflag [#allocation4], %s441
          %s443 = sand.u32 %s120, 1
          %s444 = smul.addr %s443, 64
          %s445 = scalar_lea.vmem [#allocation8], %s444
          %447 = dma.done %s442, 1024
        $region60: #{tpu_custom_call.1} parent=55 // pred_fallthru
          _
      $region56: #{tpu_custom_call.1} parent=5 // pred_fallthru
        _
    $region6: #{tpu_custom_call.1} parent=1 // loop_footer
      %s21 = sadd.s32 1, %s17
    $region7: #{tpu_custom_call.1} parent=1 // loop_footer_branch
      %16 = sbr.rel target = $region3
    $region8: #{tpu_custom_call.1} parent=1 // loop_exit
      _
    %448 = vsyncpa [#allocation3], 1
    %s449 = scalar_lea.sflag [#allocation3], 1
    %450 = vsyncpa %s449, 1
    %451 = vsyncpa [#allocation6], 1
    %452 = vsyncpa [#allocation4], 1
    %s453 = scalar_lea.sflag [#allocation4], 1
    %454 = vsyncpa %s453, 1

</llo_original>
